<compile_context>
chip_gen: v7x
topology: tpu7x:2x2x1
jax: 0.10.0
libtpu: 0.0.40
codegen_flags: <defaults>
</compile_context>

<pallas_src>
import jax
import jax.numpy as jnp
from jax.experimental import pallas as pl
from jax.experimental.pallas import tpu as pltpu

D = 512  # fixed by nn.Linear(512, 512, bias=False) in the module's __init__


def _rapf_forward_kernel(scale_ref, img_ref, txt_ref, wt_ref,
                         logits_ref, imgn_ref, txtn_ref):
    # frozen (detached) image features -> adapter linear (no bias).
    # wt_ref holds W^T (in, out), so this is exactly x @ W^T with no transpose.
    x = img_ref[...]                                            # (B, D) f32
    adapted = jnp.dot(x, wt_ref[...],
                      preferred_element_type=jnp.float32)       # (B, D)

    # image_features / image_features.norm(dim=1, keepdim=True)
    # rsqrt goes to the EUP; multiply replaces the VPU divide.
    inv_img = jax.lax.rsqrt(jnp.sum(adapted * adapted, axis=-1, keepdims=True))
    img_n = adapted * inv_img

    # text_features / text_features.norm(dim=1, keepdim=True)
    t = txt_ref[...]                                            # (Cpad, D)
    inv_txt = jax.lax.rsqrt(jnp.sum(t * t, axis=-1, keepdims=True))
    txt_n = t * inv_txt

    # logit_scale.exp() * image_features @ text_features.t()
    # exp already applied in the wrapper; contraction on last dims avoids txt_n.T.
    logits = jax.lax.dot_general(
        img_n, txt_n,
        dimension_numbers=(((1,), (1,)), ((), ())),
        preferred_element_type=jnp.float32)                     # (B, Cpad)
    logits_ref[...] = scale_ref[0] * logits
    imgn_ref[...] = img_n
    txtn_ref[...] = txt_n


def rapf_forward(image_features, text_features, adapter_weight, logit_scale):
    """Fused adapter + L2-normalize + scaled similarity logits (Pallas TPU kernel).

    image_features: (B, 512) frozen CLIP visual features
    text_features : (C, 512) frozen CLIP text features (one per class prompt)
    adapter_weight: (512, 512) nn.Linear weight, (out, in)
    logit_scale   : (1,) scalar log-scale
    Returns (logits (B, C), normalized image features (B, 512),
             normalized text features (C, 512)).
    """
    B = image_features.shape[0]
    C = text_features.shape[0]

    # --- wrapper-side preconditioning (pure layout / hoisted scalar work) ---
    # nn.Linear applies x @ W^T; pre-transpose once so the kernel never does.
    w_t = jnp.asarray(adapter_weight, jnp.float32).T            # (in, out)
    # hoist exp(logit_scale) out of the kernel
    scale = jnp.exp(jnp.asarray(logit_scale, jnp.float32)).reshape((1,))
    # pad class dim to a multiple of 128 for lane-dense logits stores; pad rows
    # are ones (not zeros) so their norm is finite -> no NaN, sliced off below.
    c_pad = ((C + 127) // 128) * 128
    if c_pad != C:
        txt_in = jnp.concatenate(
            [jnp.asarray(text_features, jnp.float32),
             jnp.ones((c_pad - C, D), jnp.float32)], axis=0)
    else:
        txt_in = jnp.asarray(text_features, jnp.float32)
    img_in = jnp.asarray(image_features, jnp.float32)

    flops = 2 * B * D * D + 2 * B * c_pad * D
    bytes_accessed = 4 * (B * D + c_pad * D + D * D          # inputs
                          + B * c_pad + B * D + c_pad * D)    # outputs
    cost = pl.CostEstimate(flops=flops,
                           transcendentals=B + c_pad,
                           bytes_accessed=bytes_accessed)

    # Shapes are small (~2 MiB total incl. the 1 MiB weight) -> one grid step,
    # whole arrays resident in VMEM.
    # TODO(synk): if B grows (memory_data / edge_sample concatenation), add a
    # grid over B with (128-256, 512) blocks and dimension_semantics=("parallel",)
    # to use both v7x TensorCores; re-derive tile sizes against 64 MiB VMEM.
    logits_p, img_n, txt_n_p = pl.pallas_call(
        _rapf_forward_kernel,
        out_shape=(
            jax.ShapeDtypeStruct((B, c_pad), jnp.float32),
            jax.ShapeDtypeStruct((B, D), jnp.float32),
            jax.ShapeDtypeStruct((c_pad, D), jnp.float32),
        ),
        in_specs=[
            pl.BlockSpec(memory_space=pltpu.MemorySpace.SMEM),   # exp(logit_scale)
            pl.BlockSpec(memory_space=pltpu.MemorySpace.VMEM),   # image feats
            pl.BlockSpec(memory_space=pltpu.MemorySpace.VMEM),   # text feats (padded)
            pl.BlockSpec(memory_space=pltpu.MemorySpace.VMEM),   # adapter W^T
        ],
        out_specs=(
            pl.BlockSpec(memory_space=pltpu.MemorySpace.VMEM),
            pl.BlockSpec(memory_space=pltpu.MemorySpace.VMEM),
            pl.BlockSpec(memory_space=pltpu.MemorySpace.VMEM),
        ),
        cost_estimate=cost,
    )(scale, img_in, txt_in, w_t)

    return logits_p[:, :C], img_n, txt_n_p[:C]


def rapf_forward_ref(image_features, text_features, adapter_weight, logit_scale):
    """Plain-JAX reference mirroring the PyTorch forward()."""
    adapted = image_features @ adapter_weight.T
    img_n = adapted / jnp.linalg.norm(adapted, axis=1, keepdims=True)
    txt_n = text_features / jnp.linalg.norm(text_features, axis=1, keepdims=True)
    logits = jnp.exp(logit_scale[0]) * img_n @ txt_n.T
    return logits, img_n, txt_n


if __name__ == "__main__":
    key = jax.random.PRNGKey(0)
    k_img, k_txt, k_w = jax.random.split(key, 3)

    batch = 8           # image batch
    num_classes = 10    # current_class_names size (text prompts)

    # Frozen CLIP encoder outputs (synthesized; see layout comment above).
    image_features = jax.random.normal(k_img, (batch, D), dtype=jnp.float32)
    text_features = jax.random.normal(k_txt, (num_classes, D), dtype=jnp.float32)

    # Deterministic parameter init for the adapter (nn.Linear(512, 512, bias=False)).
    adapter_weight = (jax.random.normal(k_w, (D, D), dtype=jnp.float32)
                      * (1.0 / jnp.sqrt(D)))
    # CLIP default logit_scale init: log(1 / 0.07)
    logit_scale = jnp.array([jnp.log(1.0 / 0.07)], dtype=jnp.float32)

    # NOTE: memory_data / edge_sample branches are plain row-concats before the
    # adapter; if supplied, concatenate them onto image_features in JAX glue
    # before calling rapf_forward (semantics identical).

    logits, img_n, txt_n = rapf_forward(
        image_features, text_features, adapter_weight, logit_scale)
    jax.block_until_ready((logits, img_n, txt_n))

    logits_r, img_n_r, txt_n_r = rapf_forward_ref(
        image_features, text_features, adapter_weight, logit_scale)

    assert logits.shape == (batch, num_classes)
    assert img_n.shape == (batch, D)
    assert txt_n.shape == (num_classes, D)
    assert jnp.allclose(logits, logits_r, rtol=1e-4, atol=1e-4)
    assert jnp.allclose(img_n, img_n_r, rtol=1e-4, atol=1e-5)
    assert jnp.allclose(txt_n, txt_n_r, rtol=1e-4, atol=1e-5)

    print("KERNEL_OK")
</pallas_src>

<mosaic_0001>
module attributes {stable_mosaic.version = 11 : i64} {
  func.func @_rapf_forward_kernel(%arg0: memref<1xf32, #tpu.memory_space<smem>>, %arg1: memref<8x512xf32, #tpu.memory_space<vmem>>, %arg2: memref<128x512xf32, #tpu.memory_space<vmem>>, %arg3: memref<512x512xf32, #tpu.memory_space<vmem>>, %arg4: memref<8x128xf32, #tpu.memory_space<vmem>>, %arg5: memref<8x512xf32, #tpu.memory_space<vmem>>, %arg6: memref<128x512xf32, #tpu.memory_space<vmem>>) attributes {dimension_semantics = [], scalar_prefetch = 0 : i64, scratch_operands = 0 : i64, tpu.core_type = #tpu.core_type<tc>} {
    %c0 = arith.constant 0 : index
    %c0_0 = arith.constant 0 : index
    %0 = vector.load %arg1[%c0, %c0_0] : memref<8x512xf32, #tpu.memory_space<vmem>>, vector<8x512xf32>
    %c0_1 = arith.constant 0 : index
    %c0_2 = arith.constant 0 : index
    %1 = vector.load %arg3[%c0_1, %c0_2] : memref<512x512xf32, #tpu.memory_space<vmem>>, vector<512x512xf32>
    %cst = arith.constant dense<0.000000e+00> : vector<8x512xf32>
    %2 = tpu.matmul %0, %1, %cst {dimension_numbers = #tpu.dot_dimension_numbers<[1], [0], [0], [1], [0, 0, 1, 1], [], []>} : vector<8x512xf32>, vector<512x512xf32>, vector<8x512xf32> -> vector<8x512xf32>
    %3 = arith.mulf %2, %2 : vector<8x512xf32>
    %cst_3 = arith.constant dense<0.000000e+00> : vector<8xf32>
    %4 = vector.multi_reduction <add>, %3, %cst_3 [1] : vector<8x512xf32> to vector<8xf32>
    %5 = vector.shape_cast %4 : vector<8xf32> to vector<8x1xf32>
    %6 = math.rsqrt %5 : vector<8x1xf32>
    %7 = vector.broadcast %6 : vector<8x1xf32> to vector<8x512xf32>
    %8 = arith.mulf %2, %7 : vector<8x512xf32>
    %c0_4 = arith.constant 0 : index
    %c0_5 = arith.constant 0 : index
    %9 = vector.load %arg2[%c0_4, %c0_5] : memref<128x512xf32, #tpu.memory_space<vmem>>, vector<128x512xf32>
    %10 = arith.mulf %9, %9 : vector<128x512xf32>
    %cst_6 = arith.constant dense<0.000000e+00> : vector<128xf32>
    %11 = vector.multi_reduction <add>, %10, %cst_6 [1] : vector<128x512xf32> to vector<128xf32>
    %12 = vector.shape_cast %11 : vector<128xf32> to vector<128x1xf32>
    %13 = math.rsqrt %12 : vector<128x1xf32>
    %14 = vector.broadcast %13 : vector<128x1xf32> to vector<128x512xf32>
    %15 = arith.mulf %9, %14 : vector<128x512xf32>
    %cst_7 = arith.constant dense<0.000000e+00> : vector<8x128xf32>
    %16 = tpu.matmul %8, %15, %cst_7 {dimension_numbers = #tpu.dot_dimension_numbers<[1], [1], [0], [0], [0, 0, 1, 0], [], []>} : vector<8x512xf32>, vector<128x512xf32>, vector<8x128xf32> -> vector<8x128xf32>
    %c0_8 = arith.constant 0 : index
    %17 = memref.load %arg0[%c0_8] : memref<1xf32, #tpu.memory_space<smem>>
    %18 = vector.broadcast %17 : f32 to vector<8x128xf32>
    %19 = arith.mulf %18, %16 : vector<8x128xf32>
    %c0_9 = arith.constant 0 : index
    %c0_10 = arith.constant 0 : index
    %20 = vector.load %arg4[%c0_9, %c0_10] : memref<8x128xf32, #tpu.memory_space<vmem>>, vector<8x128xf32>
    tpu.vector_store %arg4[%c0_9, %c0_10], %19 {strides = array<i32>} : memref<8x128xf32, #tpu.memory_space<vmem>>, vector<8x128xf32>,
    %c0_11 = arith.constant 0 : index
    %c0_12 = arith.constant 0 : index
    %21 = vector.load %arg5[%c0_11, %c0_12] : memref<8x512xf32, #tpu.memory_space<vmem>>, vector<8x512xf32>
    tpu.vector_store %arg5[%c0_11, %c0_12], %8 {strides = array<i32>} : memref<8x512xf32, #tpu.memory_space<vmem>>, vector<8x512xf32>,
    %c0_13 = arith.constant 0 : index
    %c0_14 = arith.constant 0 : index
    %22 = vector.load %arg6[%c0_13, %c0_14] : memref<128x512xf32, #tpu.memory_space<vmem>>, vector<128x512xf32>
    tpu.vector_store %arg6[%c0_13, %c0_14], %15 {strides = array<i32>} : memref<128x512xf32, #tpu.memory_space<vmem>>, vector<128x512xf32>,
    return
  }
}

</mosaic_0001>

<llo_original>
// kernel: tpu_custom_call.1
$region0: #{tpu_custom_call.1}
  #allocation0 [shape = 'u32[]', space=smem, size = 0x4, offset = 0x4, fixed_abs, tag = 'smem constant byte address 0x4 - core index']
  #allocation1 [shape = 'u32[144,128]{1,0:T(1,128)}', space=vmem, size = 0x12000, scoped, tag = 'internal scratch']
  #allocation2 [shape = 'f32[1]{0:T(128)S(6)}', space=smem, size = 0x200, scoped, tag = 'scoped memory for tpu_custom_call.1']
  %s0 = inlined_call_operand.<no memory space> [shape: f32[1], index: 0, kind: input, shape index: {}]
  %s1 = inlined_call_operand.hbm [shape: f32[8,512], index: 1, kind: input, shape index: {}]
  %s2 = inlined_call_operand.hbm [shape: f32[128,512], index: 2, kind: input, shape index: {}]
  %s3 = inlined_call_operand.hbm [shape: f32[512,512], index: 3, kind: input, shape index: {}]
  %s4 = inlined_call_operand.hbm [shape: f32[8,128], index: 4, kind: output, shape index: {0}]
  %s5 = inlined_call_operand.hbm [shape: f32[8,512], index: 5, kind: output, shape index: {1}]
  %s6 = inlined_call_operand.hbm [shape: f32[128,512], index: 6, kind: output, shape index: {2}]
  %7 = xla_tuple %s4, %s5, %s6
  %s8 = sld [smem:[#allocation0]]
  $region54: #{tpu_custom_call.1} parent=0
    _
  %s10 = ssub.s32 1, %s8
  %s11 = scalar_select 0, %s10, %s8
  %12 = sst [smem:[#allocation2]] %s0
  $region1: #{tpu_custom_call.1} parent=0
    #allocation3 [shape = 'u8[16384]{0}', space=vmem, size = 0x4000, scoped, tag = 'input window, operand 1, single buffered']
    #allocation4 [shape = 's32[1]{0}', space=sflag, size = 0x4, scoped, tag = 'scoped memory for tpu_custom_call.1']
    #allocation5 [shape = 's32[1]{0}', space=sflag, size = 0x4, scoped, tag = 'scoped memory for tpu_custom_call.1']
    #allocation6 [shape = 'u8[262144]{0}', space=vmem, size = 0x40000, scoped, tag = 'input window, operand 2, single buffered']
    #allocation7 [shape = 's32[1]{0}', space=sflag, size = 0x4, scoped, tag = 'scoped memory for tpu_custom_call.1']
    #allocation8 [shape = 'u8[1048576]{0}', space=vmem, size = 0x100000, scoped, tag = 'input window, operand 3, single buffered']
    #allocation9 [shape = 'u8[4096]{0}', space=vmem, size = 0x1000, scoped, tag = 'output window, operand 0, single buffered']
    #allocation10 [shape = 'u8[16384]{0}', space=vmem, size = 0x4000, scoped, tag = 'output window, operand 1, single buffered']
    #allocation11 [shape = 's32[1]{0}', space=sflag, size = 0x4, scoped, tag = 'scoped memory for tpu_custom_call.1']
    #allocation12 [shape = 'u8[262144]{0}', space=vmem, size = 0x40000, scoped, tag = 'output window, operand 2, single buffered']
    %13 = vsyncpa [#allocation4], 0
    %14 = vsyncpa [#allocation7], 0
    %15 = vsyncpa [#allocation5], 0
    %16 = vsyncpa [#allocation11], 0
    // Predicated region
    $region2: #{tpu_custom_call.1} parent=1 // pred_check
      _
    $region3: #{tpu_custom_call.1} parent=1 // pred_check_branch
      %18 = sbr.rel (0) target = $region5
    $region4: #{tpu_custom_call.1} parent=1 // pred_region
      _
    $region5: #{tpu_custom_call.1} parent=1 // pred_fallthru
      _
    // Predicated region
    $region6: #{tpu_custom_call.1} parent=1 // pred_check
      _
    $region7: #{tpu_custom_call.1} parent=1 // pred_check_branch
      %20 = sbr.rel (0) target = $region9
    $region8: #{tpu_custom_call.1} parent=1 // pred_region
      %s22 = ssub.s32 512, 512
      %23 = vsyncadd [#allocation4], %s22
      %s25 = sshll.u32 [#allocation3], 4
      %s26 = int_to_ptr.vmem [resolvable:$true] %s25
      %28 = dma.hbm_to_vmem [thread:$0]  %s1, 512, %s26, [#allocation4]
    $region9: #{tpu_custom_call.1} parent=1 // pred_fallthru
      _
    // Predicated region
    $region10: #{tpu_custom_call.1} parent=1 // pred_check
      _
    $region11: #{tpu_custom_call.1} parent=1 // pred_check_branch
      %30 = sbr.rel (0) target = $region13
    $region12: #{tpu_custom_call.1} parent=1 // pred_region
      %s32 = ssub.s32 8192, 8192
      %33 = vsyncadd [#allocation7], %s32
      %s34 = sshll.u32 [#allocation6], 4
      %s35 = int_to_ptr.vmem [resolvable:$true] %s34
      %40 = dma.hbm_to_vmem [thread:$0]  %s2, 8192, %s35, [#allocation7], 512, 512, 32
    $region13: #{tpu_custom_call.1} parent=1 // pred_fallthru
      _
    // Predicated region
    $region14: #{tpu_custom_call.1} parent=1 // pred_check
      _
    $region15: #{tpu_custom_call.1} parent=1 // pred_check_branch
      %42 = sbr.rel (0) target = $region17
    $region16: #{tpu_custom_call.1} parent=1 // pred_region
      %s44 = ssub.s32 32768, 32768
      %45 = vsyncadd [#allocation7], %s44
      %s46 = sshll.u32 [#allocation8], 4
      %s47 = int_to_ptr.vmem [resolvable:$true] %s46
      %52 = dma.hbm_to_vmem [thread:$0]  %s3, 32768, %s47, [#allocation7], 512, 512, 32
    $region17: #{tpu_custom_call.1} parent=1 // pred_fallthru
      _
    // Predicated region
    $region18: #{tpu_custom_call.1} parent=1 // pred_check
      _
    $region19: #{tpu_custom_call.1} parent=1 // pred_check_branch
      %54 = sbr.rel (0) target = $region21
    $region20: #{tpu_custom_call.1} parent=1 // pred_region
      %55 = dma.done [#allocation4], 512
    $region21: #{tpu_custom_call.1} parent=1 // pred_fallthru
      _
    // Predicated region
    $region22: #{tpu_custom_call.1} parent=1 // pred_check
      _
    $region23: #{tpu_custom_call.1} parent=1 // pred_check_branch
      %57 = sbr.rel (0) target = $region25
    $region24: #{tpu_custom_call.1} parent=1 // pred_region
      %58 = dma.done [#allocation7], 8192
    $region25: #{tpu_custom_call.1} parent=1 // pred_fallthru
      _
    // Predicated region
    $region26: #{tpu_custom_call.1} parent=1 // pred_check
      _
    $region27: #{tpu_custom_call.1} parent=1 // pred_check_branch
      %60 = sbr.rel (0) target = $region29
    $region28: #{tpu_custom_call.1} parent=1 // pred_region
      %61 = dma.done [#allocation7], 32768
    $region29: #{tpu_custom_call.1} parent=1 // pred_fallthru
      _
    %v62 = vld [vmem:[#allocation3] sm:$0xff]
    %v63 = vld [vmem:[#allocation3 + $0x8] sm:$0xff]
    %v64 = vld [vmem:[#allocation3 + $0x10] sm:$0xff]
    %v65 = vld [vmem:[#allocation3 + $0x18] sm:$0xff]
    %v66 = vld [vmem:[#allocation8] sm:$0xff]
    %v67 = vld [vmem:[#allocation8 + $0x8] sm:$0xff]
    %v68 = vld [vmem:[#allocation8 + $0x10] sm:$0xff]
    %v69 = vld [vmem:[#allocation8 + $0x18] sm:$0xff]
    %v70 = vld [vmem:[#allocation8 + $0x20] sm:$0xff]
    %v71 = vld [vmem:[#allocation8 + $0x28] sm:$0xff]
    %v72 = vld [vmem:[#allocation8 + $0x30] sm:$0xff]
    %v73 = vld [vmem:[#allocation8 + $0x38] sm:$0xff]
    %v74 = vld [vmem:[#allocation8 + $0x40] sm:$0xff]
    %v75 = vld [vmem:[#allocation8 + $0x48] sm:$0xff]
    %v76 = vld [vmem:[#allocation8 + $0x50] sm:$0xff]
    %v77 = vld [vmem:[#allocation8 + $0x58] sm:$0xff]
    %v78 = vld [vmem:[#allocation8 + $0x60] sm:$0xff]
    %v79 = vld [vmem:[#allocation8 + $0x68] sm:$0xff]
    %v80 = vld [vmem:[#allocation8 + $0x70] sm:$0xff]
    %v81 = vld [vmem:[#allocation8 + $0x78] sm:$0xff]
    %v82 = vld [vmem:[#allocation8 + $0x80] sm:$0xff]
    %v83 = vld [vmem:[#allocation8 + $0x88] sm:$0xff]
    %v84 = vld [vmem:[#allocation8 + $0x90] sm:$0xff]
    %v85 = vld [vmem:[#allocation8 + $0x98] sm:$0xff]
    %v86 = vld [vmem:[#allocation8 + $0xa0] sm:$0xff]
    %v87 = vld [vmem:[#allocation8 + $0xa8] sm:$0xff]
    %v88 = vld [vmem:[#allocation8 + $0xb0] sm:$0xff]
    %v89 = vld [vmem:[#allocation8 + $0xb8] sm:$0xff]
    %v90 = vld [vmem:[#allocation8 + $0xc0] sm:$0xff]
    %v91 = vld [vmem:[#allocation8 + $0xc8] sm:$0xff]
    %v92 = vld [vmem:[#allocation8 + $0xd0] sm:$0xff]
    %v93 = vld [vmem:[#allocation8 + $0xd8] sm:$0xff]
    %v94 = vld [vmem:[#allocation8 + $0xe0] sm:$0xff]
    %v95 = vld [vmem:[#allocation8 + $0xe8] sm:$0xff]
    %v96 = vld [vmem:[#allocation8 + $0xf0] sm:$0xff]
    %v97 = vld [vmem:[#allocation8 + $0xf8] sm:$0xff]
    %v98 = vld [vmem:[#allocation8 + $0x100] sm:$0xff]
    %v99 = vld [vmem:[#allocation8 + $0x108] sm:$0xff]
    %v100 = vld [vmem:[#allocation8 + $0x110] sm:$0xff]
    %v101 = vld [vmem:[#allocation8 + $0x118] sm:$0xff]
    %v102 = vld [vmem:[#allocation8 + $0x120] sm:$0xff]
    %v103 = vld [vmem:[#allocation8 + $0x128] sm:$0xff]
    %v104 = vld [vmem:[#allocation8 + $0x130] sm:$0xff]
    %v105 = vld [vmem:[#allocation8 + $0x138] sm:$0xff]
    %v106 = vld [vmem:[#allocation8 + $0x140] sm:$0xff]
    %v107 = vld [vmem:[#allocation8 + $0x148] sm:$0xff]
    %v108 = vld [vmem:[#allocation8 + $0x150] sm:$0xff]
    %v109 = vld [vmem:[#allocation8 + $0x158] sm:$0xff]
    %v110 = vld [vmem:[#allocation8 + $0x160] sm:$0xff]
    %v111 = vld [vmem:[#allocation8 + $0x168] sm:$0xff]
    %v112 = vld [vmem:[#allocation8 + $0x170] sm:$0xff]
    %v113 = vld [vmem:[#allocation8 + $0x178] sm:$0xff]
    %v114 = vld [vmem:[#allocation8 + $0x180] sm:$0xff]
    %v115 = vld [vmem:[#allocation8 + $0x188] sm:$0xff]
    %v116 = vld [vmem:[#allocation8 + $0x190] sm:$0xff]
    %v117 = vld [vmem:[#allocation8 + $0x198] sm:$0xff]
    %v118 = vld [vmem:[#allocation8 + $0x1a0] sm:$0xff]
    %v119 = vld [vmem:[#allocation8 + $0x1a8] sm:$0xff]
    %v120 = vld [vmem:[#allocation8 + $0x1b0] sm:$0xff]
    %v121 = vld [vmem:[#allocation8 + $0x1b8] sm:$0xff]
    %v122 = vld [vmem:[#allocation8 + $0x1c0] sm:$0xff]
    %v123 = vld [vmem:[#allocation8 + $0x1c8] sm:$0xff]
    %v124 = vld [vmem:[#allocation8 + $0x1d0] sm:$0xff]
    %v125 = vld [vmem:[#allocation8 + $0x1d8] sm:$0xff]
    %v126 = vld [vmem:[#allocation8 + $0x1e0] sm:$0xff]
    %v127 = vld [vmem:[#allocation8 + $0x1e8] sm:$0xff]
    %v128 = vld [vmem:[#allocation8 + $0x1f0] sm:$0xff]
    %v129 = vld [vmem:[#allocation8 + $0x1f8] sm:$0xff]
    %v130 = vld [vmem:[#allocation8 + $0x200] sm:$0xff]
    %v131 = vld [vmem:[#allocation8 + $0x208] sm:$0xff]
    %v132 = vld [vmem:[#allocation8 + $0x210] sm:$0xff]
    %v133 = vld [vmem:[#allocation8 + $0x218] sm:$0xff]
    %v134 = vld [vmem:[#allocation8 + $0x220] sm:$0xff]
    %v135 = vld [vmem:[#allocation8 + $0x228] sm:$0xff]
    %v136 = vld [vmem:[#allocation8 + $0x230] sm:$0xff]
    %v137 = vld [vmem:[#allocation8 + $0x238] sm:$0xff]
    %v138 = vld [vmem:[#allocation8 + $0x240] sm:$0xff]
    %v139 = vld [vmem:[#allocation8 + $0x248] sm:$0xff]
    %v140 = vld [vmem:[#allocation8 + $0x250] sm:$0xff]
    %v141 = vld [vmem:[#allocation8 + $0x258] sm:$0xff]
    %v142 = vld [vmem:[#allocation8 + $0x260] sm:$0xff]
    %v143 = vld [vmem:[#allocation8 + $0x268] sm:$0xff]
    %v144 = vld [vmem:[#allocation8 + $0x270] sm:$0xff]
    %v145 = vld [vmem:[#allocation8 + $0x278] sm:$0xff]
    %v146 = vld [vmem:[#allocation8 + $0x280] sm:$0xff]
    %v147 = vld [vmem:[#allocation8 + $0x288] sm:$0xff]
    %v148 = vld [vmem:[#allocation8 + $0x290] sm:$0xff]
    %v149 = vld [vmem:[#allocation8 + $0x298] sm:$0xff]
    %v150 = vld [vmem:[#allocation8 + $0x2a0] sm:$0xff]
    %v151 = vld [vmem:[#allocation8 + $0x2a8] sm:$0xff]
    %v152 = vld [vmem:[#allocation8 + $0x2b0] sm:$0xff]
    %v153 = vld [vmem:[#allocation8 + $0x2b8] sm:$0xff]
    %v154 = vld [vmem:[#allocation8 + $0x2c0] sm:$0xff]
    %v155 = vld [vmem:[#allocation8 + $0x2c8] sm:$0xff]
    %v156 = vld [vmem:[#allocation8 + $0x2d0] sm:$0xff]
    %v157 = vld [vmem:[#allocation8 + $0x2d8] sm:$0xff]
    %v158 = vld [vmem:[#allocation8 + $0x2e0] sm:$0xff]
    %v159 = vld [vmem:[#allocation8 + $0x2e8] sm:$0xff]
    %v160 = vld [vmem:[#allocation8 + $0x2f0] sm:$0xff]
    %v161 = vld [vmem:[#allocation8 + $0x2f8] sm:$0xff]
    %v162 = vld [vmem:[#allocation8 + $0x300] sm:$0xff]
    %v163 = vld [vmem:[#allocation8 + $0x308] sm:$0xff]
    %v164 = vld [vmem:[#allocation8 + $0x310] sm:$0xff]
    %v165 = vld [vmem:[#allocation8 + $0x318] sm:$0xff]
    %v166 = vld [vmem:[#allocation8 + $0x320] sm:$0xff]
    %v167 = vld [vmem:[#allocation8 + $0x328] sm:$0xff]
    %v168 = vld [vmem:[#allocation8 + $0x330] sm:$0xff]
    %v169 = vld [vmem:[#allocation8 + $0x338] sm:$0xff]
    %v170 = vld [vmem:[#allocation8 + $0x340] sm:$0xff]
    %v171 = vld [vmem:[#allocation8 + $0x348] sm:$0xff]
    %v172 = vld [vmem:[#allocation8 + $0x350] sm:$0xff]
    %v173 = vld [vmem:[#allocation8 + $0x358] sm:$0xff]
    %v174 = vld [vmem:[#allocation8 + $0x360] sm:$0xff]
    %v175 = vld [vmem:[#allocation8 + $0x368] sm:$0xff]
    %v176 = vld [vmem:[#allocation8 + $0x370] sm:$0xff]
    %v177 = vld [vmem:[#allocation8 + $0x378] sm:$0xff]
    %v178 = vld [vmem:[#allocation8 + $0x380] sm:$0xff]
    %v179 = vld [vmem:[#allocation8 + $0x388] sm:$0xff]
    %v180 = vld [vmem:[#allocation8 + $0x390] sm:$0xff]
    %v181 = vld [vmem:[#allocation8 + $0x398] sm:$0xff]
    %v182 = vld [vmem:[#allocation8 + $0x3a0] sm:$0xff]
    %v183 = vld [vmem:[#allocation8 + $0x3a8] sm:$0xff]
    %v184 = vld [vmem:[#allocation8 + $0x3b0] sm:$0xff]
    %v185 = vld [vmem:[#allocation8 + $0x3b8] sm:$0xff]
    %v186 = vld [vmem:[#allocation8 + $0x3c0] sm:$0xff]
    %v187 = vld [vmem:[#allocation8 + $0x3c8] sm:$0xff]
    %v188 = vld [vmem:[#allocation8 + $0x3d0] sm:$0xff]
    %v189 = vld [vmem:[#allocation8 + $0x3d8] sm:$0xff]
    %v190 = vld [vmem:[#allocation8 + $0x3e0] sm:$0xff]
    %v191 = vld [vmem:[#allocation8 + $0x3e8] sm:$0xff]
    %v192 = vld [vmem:[#allocation8 + $0x3f0] sm:$0xff]
    %v193 = vld [vmem:[#allocation8 + $0x3f8] sm:$0xff]
    %v194 = vld [vmem:[#allocation8 + $0x400] sm:$0xff]
    %v195 = vld [vmem:[#allocation8 + $0x408] sm:$0xff]
    %v196 = vld [vmem:[#allocation8 + $0x410] sm:$0xff]
    %v197 = vld [vmem:[#allocation8 + $0x418] sm:$0xff]
    %v198 = vld [vmem:[#allocation8 + $0x420] sm:$0xff]
    %v199 = vld [vmem:[#allocation8 + $0x428] sm:$0xff]
    %v200 = vld [vmem:[#allocation8 + $0x430] sm:$0xff]
    %v201 = vld [vmem:[#allocation8 + $0x438] sm:$0xff]
    %v202 = vld [vmem:[#allocation8 + $0x440] sm:$0xff]
    %v203 = vld [vmem:[#allocation8 + $0x448] sm:$0xff]
    %v204 = vld [vmem:[#allocation8 + $0x450] sm:$0xff]
    %v205 = vld [vmem:[#allocation8 + $0x458] sm:$0xff]
    %v206 = vld [vmem:[#allocation8 + $0x460] sm:$0xff]
    %v207 = vld [vmem:[#allocation8 + $0x468] sm:$0xff]
    %v208 = vld [vmem:[#allocation8 + $0x470] sm:$0xff]
    %v209 = vld [vmem:[#allocation8 + $0x478] sm:$0xff]
    %v210 = vld [vmem:[#allocation8 + $0x480] sm:$0xff]
    %v211 = vld [vmem:[#allocation8 + $0x488] sm:$0xff]
    %v212 = vld [vmem:[#allocation8 + $0x490] sm:$0xff]
    %v213 = vld [vmem:[#allocation8 + $0x498] sm:$0xff]
    %v214 = vld [vmem:[#allocation8 + $0x4a0] sm:$0xff]
    %v215 = vld [vmem:[#allocation8 + $0x4a8] sm:$0xff]
    %v216 = vld [vmem:[#allocation8 + $0x4b0] sm:$0xff]
    %v217 = vld [vmem:[#allocation8 + $0x4b8] sm:$0xff]
    %v218 = vld [vmem:[#allocation8 + $0x4c0] sm:$0xff]
    %v219 = vld [vmem:[#allocation8 + $0x4c8] sm:$0xff]
    %v220 = vld [vmem:[#allocation8 + $0x4d0] sm:$0xff]
    %v221 = vld [vmem:[#allocation8 + $0x4d8] sm:$0xff]
    %v222 = vld [vmem:[#allocation8 + $0x4e0] sm:$0xff]
    %v223 = vld [vmem:[#allocation8 + $0x4e8] sm:$0xff]
    %v224 = vld [vmem:[#allocation8 + $0x4f0] sm:$0xff]
    %v225 = vld [vmem:[#allocation8 + $0x4f8] sm:$0xff]
    %v226 = vld [vmem:[#allocation8 + $0x500] sm:$0xff]
    %v227 = vld [vmem:[#allocation8 + $0x508] sm:$0xff]
    %v228 = vld [vmem:[#allocation8 + $0x510] sm:$0xff]
    %v229 = vld [vmem:[#allocation8 + $0x518] sm:$0xff]
    %v230 = vld [vmem:[#allocation8 + $0x520] sm:$0xff]
    %v231 = vld [vmem:[#allocation8 + $0x528] sm:$0xff]
    %v232 = vld [vmem:[#allocation8 + $0x530] sm:$0xff]
    %v233 = vld [vmem:[#allocation8 + $0x538] sm:$0xff]
    %v234 = vld [vmem:[#allocation8 + $0x540] sm:$0xff]
    %v235 = vld [vmem:[#allocation8 + $0x548] sm:$0xff]
    %v236 = vld [vmem:[#allocation8 + $0x550] sm:$0xff]
    %v237 = vld [vmem:[#allocation8 + $0x558] sm:$0xff]
    %v238 = vld [vmem:[#allocation8 + $0x560] sm:$0xff]
    %v239 = vld [vmem:[#allocation8 + $0x568] sm:$0xff]
    %v240 = vld [vmem:[#allocation8 + $0x570] sm:$0xff]
    %v241 = vld [vmem:[#allocation8 + $0x578] sm:$0xff]
    %v242 = vld [vmem:[#allocation8 + $0x580] sm:$0xff]
    %v243 = vld [vmem:[#allocation8 + $0x588] sm:$0xff]
    %v244 = vld [vmem:[#allocation8 + $0x590] sm:$0xff]
    %v245 = vld [vmem:[#allocation8 + $0x598] sm:$0xff]
    %v246 = vld [vmem:[#allocation8 + $0x5a0] sm:$0xff]
    %v247 = vld [vmem:[#allocation8 + $0x5a8] sm:$0xff]
    %v248 = vld [vmem:[#allocation8 + $0x5b0] sm:$0xff]
    %v249 = vld [vmem:[#allocation8 + $0x5b8] sm:$0xff]
    %v250 = vld [vmem:[#allocation8 + $0x5c0] sm:$0xff]
    %v251 = vld [vmem:[#allocation8 + $0x5c8] sm:$0xff]
    %v252 = vld [vmem:[#allocation8 + $0x5d0] sm:$0xff]
    %v253 = vld [vmem:[#allocation8 + $0x5d8] sm:$0xff]
    %v254 = vld [vmem:[#allocation8 + $0x5e0] sm:$0xff]
    %v255 = vld [vmem:[#allocation8 + $0x5e8] sm:$0xff]
    %v256 = vld [vmem:[#allocation8 + $0x5f0] sm:$0xff]
    %v257 = vld [vmem:[#allocation8 + $0x5f8] sm:$0xff]
    %v258 = vld [vmem:[#allocation8 + $0x600] sm:$0xff]
    %v259 = vld [vmem:[#allocation8 + $0x608] sm:$0xff]
    %v260 = vld [vmem:[#allocation8 + $0x610] sm:$0xff]
    %v261 = vld [vmem:[#allocation8 + $0x618] sm:$0xff]
    %v262 = vld [vmem:[#allocation8 + $0x620] sm:$0xff]
    %v263 = vld [vmem:[#allocation8 + $0x628] sm:$0xff]
    %v264 = vld [vmem:[#allocation8 + $0x630] sm:$0xff]
    %v265 = vld [vmem:[#allocation8 + $0x638] sm:$0xff]
    %v266 = vld [vmem:[#allocation8 + $0x640] sm:$0xff]
    %v267 = vld [vmem:[#allocation8 + $0x648] sm:$0xff]
    %v268 = vld [vmem:[#allocation8 + $0x650] sm:$0xff]
    %v269 = vld [vmem:[#allocation8 + $0x658] sm:$0xff]
    %v270 = vld [vmem:[#allocation8 + $0x660] sm:$0xff]
    %v271 = vld [vmem:[#allocation8 + $0x668] sm:$0xff]
    %v272 = vld [vmem:[#allocation8 + $0x670] sm:$0xff]
    %v273 = vld [vmem:[#allocation8 + $0x678] sm:$0xff]
    %v274 = vld [vmem:[#allocation8 + $0x680] sm:$0xff]
    %v275 = vld [vmem:[#allocation8 + $0x688] sm:$0xff]
    %v276 = vld [vmem:[#allocation8 + $0x690] sm:$0xff]
    %v277 = vld [vmem:[#allocation8 + $0x698] sm:$0xff]
    %v278 = vld [vmem:[#allocation8 + $0x6a0] sm:$0xff]
    %v279 = vld [vmem:[#allocation8 + $0x6a8] sm:$0xff]
    %v280 = vld [vmem:[#allocation8 + $0x6b0] sm:$0xff]
    %v281 = vld [vmem:[#allocation8 + $0x6b8] sm:$0xff]
    %v282 = vld [vmem:[#allocation8 + $0x6c0] sm:$0xff]
    %v283 = vld [vmem:[#allocation8 + $0x6c8] sm:$0xff]
    %v284 = vld [vmem:[#allocation8 + $0x6d0] sm:$0xff]
    %v285 = vld [vmem:[#allocation8 + $0x6d8] sm:$0xff]
    %v286 = vld [vmem:[#allocation8 + $0x6e0] sm:$0xff]
    %v287 = vld [vmem:[#allocation8 + $0x6e8] sm:$0xff]
    %v288 = vld [vmem:[#allocation8 + $0x6f0] sm:$0xff]
    %v289 = vld [vmem:[#allocation8 + $0x6f8] sm:$0xff]
    %v290 = vld [vmem:[#allocation8 + $0x700] sm:$0xff]
    %v291 = vld [vmem:[#allocation8 + $0x708] sm:$0xff]
    %v292 = vld [vmem:[#allocation8 + $0x710] sm:$0xff]
    %v293 = vld [vmem:[#allocation8 + $0x718] sm:$0xff]
    %v294 = vld [vmem:[#allocation8 + $0x720] sm:$0xff]
    %v295 = vld [vmem:[#allocation8 + $0x728] sm:$0xff]
    %v296 = vld [vmem:[#allocation8 + $0x730] sm:$0xff]
    %v297 = vld [vmem:[#allocation8 + $0x738] sm:$0xff]
    %v298 = vld [vmem:[#allocation8 + $0x740] sm:$0xff]
    %v299 = vld [vmem:[#allocation8 + $0x748] sm:$0xff]
    %v300 = vld [vmem:[#allocation8 + $0x750] sm:$0xff]
    %v301 = vld [vmem:[#allocation8 + $0x758] sm:$0xff]
    %v302 = vld [vmem:[#allocation8 + $0x760] sm:$0xff]
    %v303 = vld [vmem:[#allocation8 + $0x768] sm:$0xff]
    %v304 = vld [vmem:[#allocation8 + $0x770] sm:$0xff]
    %v305 = vld [vmem:[#allocation8 + $0x778] sm:$0xff]
    %v306 = vld [vmem:[#allocation8 + $0x780] sm:$0xff]
    %v307 = vld [vmem:[#allocation8 + $0x788] sm:$0xff]
    %v308 = vld [vmem:[#allocation8 + $0x790] sm:$0xff]
    %v309 = vld [vmem:[#allocation8 + $0x798] sm:$0xff]
    %v310 = vld [vmem:[#allocation8 + $0x7a0] sm:$0xff]
    %v311 = vld [vmem:[#allocation8 + $0x7a8] sm:$0xff]
    %v312 = vld [vmem:[#allocation8 + $0x7b0] sm:$0xff]
    %v313 = vld [vmem:[#allocation8 + $0x7b8] sm:$0xff]
    %v314 = vld [vmem:[#allocation8 + $0x7c0] sm:$0xff]
    %v315 = vld [vmem:[#allocation8 + $0x7c8] sm:$0xff]
    %v316 = vld [vmem:[#allocation8 + $0x7d0] sm:$0xff]
    %v317 = vld [vmem:[#allocation8 + $0x7d8] sm:$0xff]
    %v318 = vld [vmem:[#allocation8 + $0x7e0] sm:$0xff]
    %v319 = vld [vmem:[#allocation8 + $0x7e8] sm:$0xff]
    %v320 = vld [vmem:[#allocation8 + $0x7f0] sm:$0xff]
    %v321 = vld [vmem:[#allocation8 + $0x7f8] sm:$0xff]
    %322 = vmatprep.subr.mxu0 %v67
    %323 = vmatpush1.msra.mxu0 %v66
    %324 = vmatprep.subr.mxu0 %v71
    %325 = vmatpush1.msra.mxu0 %v70
    %326 = vmatprep.subr.mxu0 %v75
    %327 = vmatpush1.msra.mxu0 %v74
    %328 = vmatprep.subr.mxu0 %v79
    %329 = vmatpush1.msra.mxu0 %v78
    %330 = vmatprep.subr.mxu0 %v83
    %331 = vmatpush1.msra.mxu0 %v82
    %332 = vmatprep.subr.mxu0 %v87
    %333 = vmatpush1.msra.mxu0 %v86
    %334 = vmatprep.subr.mxu0 %v91
    %335 = vmatpush1.msra.mxu0 %v90
    %336 = vmatprep.subr.mxu0 %v95
    %337 = vmatpush1.msra.mxu0 %v94
    %338 = vmatprep.subr.mxu0 %v99
    %339 = vmatpush1.msra.mxu0 %v98
    %340 = vmatprep.subr.mxu0 %v103
    %341 = vmatpush1.msra.mxu0 %v102
    %342 = vmatprep.subr.mxu0 %v107
    %343 = vmatpush1.msra.mxu0 %v106
    %344 = vmatprep.subr.mxu0 %v111
    %345 = vmatpush1.msra.mxu0 %v110
    %346 = vmatprep.subr.mxu0 %v115
    %347 = vmatpush1.msra.mxu0 %v114
    %348 = vmatprep.subr.mxu0 %v119
    %349 = vmatpush1.msra.mxu0 %v118
    %350 = vmatprep.subr.mxu0 %v123
    %351 = vmatpush1.msra.mxu0 %v122
    %352 = vmatprep.subr.mxu0 %v127
    %353 = vmatpush1.msra.mxu0 %v126
    %354 = vmatprep.subr.mxu0 %v131
    %355 = vmatpush1.msra.mxu0 %v130
    %356 = vmatprep.subr.mxu0 %v135
    %357 = vmatpush1.msra.mxu0 %v134
    %358 = vmatprep.subr.mxu0 %v139
    %359 = vmatpush1.msra.mxu0 %v138
    %360 = vmatprep.subr.mxu0 %v143
    %361 = vmatpush1.msra.mxu0 %v142
    %362 = vmatprep.subr.mxu0 %v147
    %363 = vmatpush1.msra.mxu0 %v146
    %364 = vmatprep.subr.mxu0 %v151
    %365 = vmatpush1.msra.mxu0 %v150
    %366 = vmatprep.subr.mxu0 %v155
    %367 = vmatpush1.msra.mxu0 %v154
    %368 = vmatprep.subr.mxu0 %v159
    %369 = vmatpush1.msra.mxu0 %v158
    %370 = vmatprep.subr.mxu0 %v163
    %371 = vmatpush1.msra.mxu0 %v162
    %372 = vmatprep.subr.mxu0 %v167
    %373 = vmatpush1.msra.mxu0 %v166
    %374 = vmatprep.subr.mxu0 %v171
    %375 = vmatpush1.msra.mxu0 %v170
    %376 = vmatprep.subr.mxu0 %v175
    %377 = vmatpush1.msra.mxu0 %v174
    %378 = vmatprep.subr.mxu0 %v179
    %379 = vmatpush1.msra.mxu0 %v178
    %380 = vmatprep.subr.mxu0 %v183
    %381 = vmatpush1.msra.mxu0 %v182
    %382 = vmatprep.subr.mxu0 %v187
    %383 = vmatpush1.msra.mxu0 %v186
    %384 = vmatprep.subr.mxu0 %v191
    %385 = vmatpush1.msra.mxu0 %v190
    %386 = vmatprep.mubr.f32.mxu0 %v63
    %387 = vmatmul.mubr.f32.gmra.mrb[0].mxu0 %v62
    %v388 = vpop.f32.mrb[0].mxu0
    %v389 = vadd.f32 0.0, %v388
    %v390 = vpop.f32.mrb[0].mxu0
    %v391 = vadd.f32 0.0, %v390
    %392 = vdwg.mxu0
    %393 = vmatprep.subr.mxu0 %v195
    %394 = vmatpush1.msra.mxu0 %v194
    %395 = vmatprep.subr.mxu0 %v199
    %396 = vmatpush1.msra.mxu0 %v198
    %397 = vmatprep.subr.mxu0 %v203
    %398 = vmatpush1.msra.mxu0 %v202
    %399 = vmatprep.subr.mxu0 %v207
    %400 = vmatpush1.msra.mxu0 %v206
    %401 = vmatprep.subr.mxu0 %v211
    %402 = vmatpush1.msra.mxu0 %v210
    %403 = vmatprep.subr.mxu0 %v215
    %404 = vmatpush1.msra.mxu0 %v214
    %405 = vmatprep.subr.mxu0 %v219
    %406 = vmatpush1.msra.mxu0 %v218
    %407 = vmatprep.subr.mxu0 %v223
    %408 = vmatpush1.msra.mxu0 %v222
    %409 = vmatprep.subr.mxu0 %v227
    %410 = vmatpush1.msra.mxu0 %v226
    %411 = vmatprep.subr.mxu0 %v231
    %412 = vmatpush1.msra.mxu0 %v230
    %413 = vmatprep.subr.mxu0 %v235
    %414 = vmatpush1.msra.mxu0 %v234
    %415 = vmatprep.subr.mxu0 %v239
    %416 = vmatpush1.msra.mxu0 %v238
    %417 = vmatprep.subr.mxu0 %v243
    %418 = vmatpush1.msra.mxu0 %v242
    %419 = vmatprep.subr.mxu0 %v247
    %420 = vmatpush1.msra.mxu0 %v246
    %421 = vmatprep.subr.mxu0 %v251
    %422 = vmatpush1.msra.mxu0 %v250
    %423 = vmatprep.subr.mxu0 %v255
    %424 = vmatpush1.msra.mxu0 %v254
    %425 = vmatprep.subr.mxu0 %v259
    %426 = vmatpush1.msra.mxu0 %v258
    %427 = vmatprep.subr.mxu0 %v263
    %428 = vmatpush1.msra.mxu0 %v262
    %429 = vmatprep.subr.mxu0 %v267
    %430 = vmatpush1.msra.mxu0 %v266
    %431 = vmatprep.subr.mxu0 %v271
    %432 = vmatpush1.msra.mxu0 %v270
    %433 = vmatprep.subr.mxu0 %v275
    %434 = vmatpush1.msra.mxu0 %v274
    %435 = vmatprep.subr.mxu0 %v279
    %436 = vmatpush1.msra.mxu0 %v278
    %437 = vmatprep.subr.mxu0 %v283
    %438 = vmatpush1.msra.mxu0 %v282
    %439 = vmatprep.subr.mxu0 %v287
    %440 = vmatpush1.msra.mxu0 %v286
    %441 = vmatprep.subr.mxu0 %v291
    %442 = vmatpush1.msra.mxu0 %v290
    %443 = vmatprep.subr.mxu0 %v295
    %444 = vmatpush1.msra.mxu0 %v294
    %445 = vmatprep.subr.mxu0 %v299
    %446 = vmatpush1.msra.mxu0 %v298
    %447 = vmatprep.subr.mxu0 %v303
    %448 = vmatpush1.msra.mxu0 %v302
    %449 = vmatprep.subr.mxu0 %v307
    %450 = vmatpush1.msra.mxu0 %v306
    %451 = vmatprep.subr.mxu0 %v311
    %452 = vmatpush1.msra.mxu0 %v310
    %453 = vmatprep.subr.mxu0 %v315
    %454 = vmatpush1.msra.mxu0 %v314
    %455 = vmatprep.subr.mxu0 %v319
    %456 = vmatpush1.msra.mxu0 %v318
    %457 = vmatprep.mubr.f32.mxu0 %v65
    %458 = vmatmul.mubr.f32.gmra.mrb[0].mxu0 %v64
    %v459 = vpop.f32.mrb[0].mxu0
    %v460 = vadd.f32 %v389, %v459
    %v461 = vpop.f32.mrb[0].mxu0
    %v462 = vadd.f32 %v391, %v461
    %463 = vdwg.mxu0
    %464 = vmatprep.subr.mxu0 %v69
    %465 = vmatpush1.msra.mxu0 %v68
    %466 = vmatprep.subr.mxu0 %v73
    %467 = vmatpush1.msra.mxu0 %v72
    %468 = vmatprep.subr.mxu0 %v77
    %469 = vmatpush1.msra.mxu0 %v76
    %470 = vmatprep.subr.mxu0 %v81
    %471 = vmatpush1.msra.mxu0 %v80
    %472 = vmatprep.subr.mxu0 %v85
    %473 = vmatpush1.msra.mxu0 %v84
    %474 = vmatprep.subr.mxu0 %v89
    %475 = vmatpush1.msra.mxu0 %v88
    %476 = vmatprep.subr.mxu0 %v93
    %477 = vmatpush1.msra.mxu0 %v92
    %478 = vmatprep.subr.mxu0 %v97
    %479 = vmatpush1.msra.mxu0 %v96
    %480 = vmatprep.subr.mxu0 %v101
    %481 = vmatpush1.msra.mxu0 %v100
    %482 = vmatprep.subr.mxu0 %v105
    %483 = vmatpush1.msra.mxu0 %v104
    %484 = vmatprep.subr.mxu0 %v109
    %485 = vmatpush1.msra.mxu0 %v108
    %486 = vmatprep.subr.mxu0 %v113
    %487 = vmatpush1.msra.mxu0 %v112
    %488 = vmatprep.subr.mxu0 %v117
    %489 = vmatpush1.msra.mxu0 %v116
    %490 = vmatprep.subr.mxu0 %v121
    %491 = vmatpush1.msra.mxu0 %v120
    %492 = vmatprep.subr.mxu0 %v125
    %493 = vmatpush1.msra.mxu0 %v124
    %494 = vmatprep.subr.mxu0 %v129
    %495 = vmatpush1.msra.mxu0 %v128
    %496 = vmatprep.subr.mxu0 %v133
    %497 = vmatpush1.msra.mxu0 %v132
    %498 = vmatprep.subr.mxu0 %v137
    %499 = vmatpush1.msra.mxu0 %v136
    %500 = vmatprep.subr.mxu0 %v141
    %501 = vmatpush1.msra.mxu0 %v140
    %502 = vmatprep.subr.mxu0 %v145
    %503 = vmatpush1.msra.mxu0 %v144
    %504 = vmatprep.subr.mxu0 %v149
    %505 = vmatpush1.msra.mxu0 %v148
    %506 = vmatprep.subr.mxu0 %v153
    %507 = vmatpush1.msra.mxu0 %v152
    %508 = vmatprep.subr.mxu0 %v157
    %509 = vmatpush1.msra.mxu0 %v156
    %510 = vmatprep.subr.mxu0 %v161
    %511 = vmatpush1.msra.mxu0 %v160
    %512 = vmatprep.subr.mxu0 %v165
    %513 = vmatpush1.msra.mxu0 %v164
    %514 = vmatprep.subr.mxu0 %v169
    %515 = vmatpush1.msra.mxu0 %v168
    %516 = vmatprep.subr.mxu0 %v173
    %517 = vmatpush1.msra.mxu0 %v172
    %518 = vmatprep.subr.mxu0 %v177
    %519 = vmatpush1.msra.mxu0 %v176
    %520 = vmatprep.subr.mxu0 %v181
    %521 = vmatpush1.msra.mxu0 %v180
    %522 = vmatprep.subr.mxu0 %v185
    %523 = vmatpush1.msra.mxu0 %v184
    %524 = vmatprep.subr.mxu0 %v189
    %525 = vmatpush1.msra.mxu0 %v188
    %526 = vmatprep.subr.mxu0 %v193
    %527 = vmatpush1.msra.mxu0 %v192
    %528 = vmatprep.mubr.f32.mxu0 %v63
    %529 = vmatmul.mubr.f32.gmra.mrb[0].mxu0 %v62
    %v530 = vpop.f32.mrb[0].mxu0
    %v531 = vadd.f32 0.0, %v530
    %v532 = vpop.f32.mrb[0].mxu0
    %v533 = vadd.f32 0.0, %v532
    %534 = vdwg.mxu0
    %535 = vmatprep.subr.mxu0 %v197
    %536 = vmatpush1.msra.mxu0 %v196
    %537 = vmatprep.subr.mxu0 %v201
    %538 = vmatpush1.msra.mxu0 %v200
    %539 = vmatprep.subr.mxu0 %v205
    %540 = vmatpush1.msra.mxu0 %v204
    %541 = vmatprep.subr.mxu0 %v209
    %542 = vmatpush1.msra.mxu0 %v208
    %543 = vmatprep.subr.mxu0 %v213
    %544 = vmatpush1.msra.mxu0 %v212
    %545 = vmatprep.subr.mxu0 %v217
    %546 = vmatpush1.msra.mxu0 %v216
    %547 = vmatprep.subr.mxu0 %v221
    %548 = vmatpush1.msra.mxu0 %v220
    %549 = vmatprep.subr.mxu0 %v225
    %550 = vmatpush1.msra.mxu0 %v224
    %551 = vmatprep.subr.mxu0 %v229
    %552 = vmatpush1.msra.mxu0 %v228
    %553 = vmatprep.subr.mxu0 %v233
    %554 = vmatpush1.msra.mxu0 %v232
    %555 = vmatprep.subr.mxu0 %v237
    %556 = vmatpush1.msra.mxu0 %v236
    %557 = vmatprep.subr.mxu0 %v241
    %558 = vmatpush1.msra.mxu0 %v240
    %559 = vmatprep.subr.mxu0 %v245
    %560 = vmatpush1.msra.mxu0 %v244
    %561 = vmatprep.subr.mxu0 %v249
    %562 = vmatpush1.msra.mxu0 %v248
    %563 = vmatprep.subr.mxu0 %v253
    %564 = vmatpush1.msra.mxu0 %v252
    %565 = vmatprep.subr.mxu0 %v257
    %566 = vmatpush1.msra.mxu0 %v256
    %567 = vmatprep.subr.mxu0 %v261
    %568 = vmatpush1.msra.mxu0 %v260
    %569 = vmatprep.subr.mxu0 %v265
    %570 = vmatpush1.msra.mxu0 %v264
    %571 = vmatprep.subr.mxu0 %v269
    %572 = vmatpush1.msra.mxu0 %v268
    %573 = vmatprep.subr.mxu0 %v273
    %574 = vmatpush1.msra.mxu0 %v272
    %575 = vmatprep.subr.mxu0 %v277
    %576 = vmatpush1.msra.mxu0 %v276
    %577 = vmatprep.subr.mxu0 %v281
    %578 = vmatpush1.msra.mxu0 %v280
    %579 = vmatprep.subr.mxu0 %v285
    %580 = vmatpush1.msra.mxu0 %v284
    %581 = vmatprep.subr.mxu0 %v289
    %582 = vmatpush1.msra.mxu0 %v288
    %583 = vmatprep.subr.mxu0 %v293
    %584 = vmatpush1.msra.mxu0 %v292
    %585 = vmatprep.subr.mxu0 %v297
    %586 = vmatpush1.msra.mxu0 %v296
    %587 = vmatprep.subr.mxu0 %v301
    %588 = vmatpush1.msra.mxu0 %v300
    %589 = vmatprep.subr.mxu0 %v305
    %590 = vmatpush1.msra.mxu0 %v304
    %591 = vmatprep.subr.mxu0 %v309
    %592 = vmatpush1.msra.mxu0 %v308
    %593 = vmatprep.subr.mxu0 %v313
    %594 = vmatpush1.msra.mxu0 %v312
    %595 = vmatprep.subr.mxu0 %v317
    %596 = vmatpush1.msra.mxu0 %v316
    %597 = vmatprep.subr.mxu0 %v321
    %598 = vmatpush1.msra.mxu0 %v320
    %599 = vmatprep.mubr.f32.mxu0 %v65
    %600 = vmatmul.mubr.f32.gmra.mrb[0].mxu0 %v64
    %v601 = vpop.f32.mrb[0].mxu0
    %v602 = vadd.f32 %v531, %v601
    %v603 = vpop.f32.mrb[0].mxu0
    %v604 = vadd.f32 %v533, %v603
    %605 = vdwg.mxu0
    %v606 = vmul.f32 %v460, %v460
    %v607 = vmul.f32 %v462, %v462
    %v608 = vmul.f32 %v602, %v602
    %v609 = vmul.f32 %v604, %v604
    %v610 = vadd.f32 %v606, %v607
    %v611 = vadd.f32 %v610, %v608
    %v612 = vadd.f32 %v611, %v609
    %613 = vadd.xlane.f32.xlu0 %v612
    %v614 = vpop.xlane.xlu0 %613
    %v615 = vrsqrt.pop %v614
    %v616 = vmul.f32 %v460, %v615
    %v617 = vmul.f32 %v462, %v615
    %v618 = vmul.f32 %v602, %v615
    %v619 = vmul.f32 %v604, %v615
    %v620 = vld [vmem:[#allocation6] sm:$0xff]
    %v621 = vld [vmem:[#allocation6 + $0x8] sm:$0xff]
    %v622 = vld [vmem:[#allocation6 + $0x10] sm:$0xff]
    %v623 = vld [vmem:[#allocation6 + $0x18] sm:$0xff]
    %v624 = vld [vmem:[#allocation6 + $0x20] sm:$0xff]
    %v625 = vld [vmem:[#allocation6 + $0x28] sm:$0xff]
    %v626 = vld [vmem:[#allocation6 + $0x30] sm:$0xff]
    %v627 = vld [vmem:[#allocation6 + $0x38] sm:$0xff]
    %v628 = vld [vmem:[#allocation6 + $0x40] sm:$0xff]
    %v629 = vld [vmem:[#allocation6 + $0x48] sm:$0xff]
    %v630 = vld [vmem:[#allocation6 + $0x50] sm:$0xff]
    %v631 = vld [vmem:[#allocation6 + $0x58] sm:$0xff]
    %v632 = vld [vmem:[#allocation6 + $0x60] sm:$0xff]
    %v633 = vld [vmem:[#allocation6 + $0x68] sm:$0xff]
    %v634 = vld [vmem:[#allocation6 + $0x70] sm:$0xff]
    %v635 = vld [vmem:[#allocation6 + $0x78] sm:$0xff]
    %v636 = vld [vmem:[#allocation6 + $0x80] sm:$0xff]
    %v637 = vld [vmem:[#allocation6 + $0x88] sm:$0xff]
    %v638 = vld [vmem:[#allocation6 + $0x90] sm:$0xff]
    %v639 = vld [vmem:[#allocation6 + $0x98] sm:$0xff]
    %v640 = vld [vmem:[#allocation6 + $0xa0] sm:$0xff]
    %v641 = vld [vmem:[#allocation6 + $0xa8] sm:$0xff]
    %v642 = vld [vmem:[#allocation6 + $0xb0] sm:$0xff]
    %v643 = vld [vmem:[#allocation6 + $0xb8] sm:$0xff]
    %v644 = vld [vmem:[#allocation6 + $0xc0] sm:$0xff]
    %v645 = vld [vmem:[#allocation6 + $0xc8] sm:$0xff]
    %v646 = vld [vmem:[#allocation6 + $0xd0] sm:$0xff]
    %v647 = vld [vmem:[#allocation6 + $0xd8] sm:$0xff]
    %v648 = vld [vmem:[#allocation6 + $0xe0] sm:$0xff]
    %v649 = vld [vmem:[#allocation6 + $0xe8] sm:$0xff]
    %v650 = vld [vmem:[#allocation6 + $0xf0] sm:$0xff]
    %v651 = vld [vmem:[#allocation6 + $0xf8] sm:$0xff]
    %v652 = vld [vmem:[#allocation6 + $0x100] sm:$0xff]
    %v653 = vld [vmem:[#allocation6 + $0x108] sm:$0xff]
    %v654 = vld [vmem:[#allocation6 + $0x110] sm:$0xff]
    %v655 = vld [vmem:[#allocation6 + $0x118] sm:$0xff]
    %v656 = vld [vmem:[#allocation6 + $0x120] sm:$0xff]
    %v657 = vld [vmem:[#allocation6 + $0x128] sm:$0xff]
    %v658 = vld [vmem:[#allocation6 + $0x130] sm:$0xff]
    %v659 = vld [vmem:[#allocation6 + $0x138] sm:$0xff]
    %v660 = vld [vmem:[#allocation6 + $0x140] sm:$0xff]
    %v661 = vld [vmem:[#allocation6 + $0x148] sm:$0xff]
    %v662 = vld [vmem:[#allocation6 + $0x150] sm:$0xff]
    %v663 = vld [vmem:[#allocation6 + $0x158] sm:$0xff]
    %v664 = vld [vmem:[#allocation6 + $0x160] sm:$0xff]
    %v665 = vld [vmem:[#allocation6 + $0x168] sm:$0xff]
    %v666 = vld [vmem:[#allocation6 + $0x170] sm:$0xff]
    %v667 = vld [vmem:[#allocation6 + $0x178] sm:$0xff]
    %v668 = vld [vmem:[#allocation6 + $0x180] sm:$0xff]
    %v669 = vld [vmem:[#allocation6 + $0x188] sm:$0xff]
    %v670 = vld [vmem:[#allocation6 + $0x190] sm:$0xff]
    %v671 = vld [vmem:[#allocation6 + $0x198] sm:$0xff]
    %v672 = vld [vmem:[#allocation6 + $0x1a0] sm:$0xff]
    %v673 = vld [vmem:[#allocation6 + $0x1a8] sm:$0xff]
    %v674 = vld [vmem:[#allocation6 + $0x1b0] sm:$0xff]
    %v675 = vld [vmem:[#allocation6 + $0x1b8] sm:$0xff]
    %v676 = vld [vmem:[#allocation6 + $0x1c0] sm:$0xff]
    %v677 = vld [vmem:[#allocation6 + $0x1c8] sm:$0xff]
    %v678 = vld [vmem:[#allocation6 + $0x1d0] sm:$0xff]
    %v679 = vld [vmem:[#allocation6 + $0x1d8] sm:$0xff]
    %v680 = vld [vmem:[#allocation6 + $0x1e0] sm:$0xff]
    %v681 = vld [vmem:[#allocation6 + $0x1e8] sm:$0xff]
    %v682 = vld [vmem:[#allocation6 + $0x1f0] sm:$0xff]
    %v683 = vld [vmem:[#allocation6 + $0x1f8] sm:$0xff]
    %v684 = vmul.f32 %v620, %v620
    %v685 = vmul.f32 %v621, %v621
    %v686 = vmul.f32 %v622, %v622
    %v687 = vmul.f32 %v623, %v623
    %v688 = vmul.f32 %v624, %v624
    %v689 = vmul.f32 %v625, %v625
    %v690 = vmul.f32 %v626, %v626
    %v691 = vmul.f32 %v627, %v627
    %v692 = vmul.f32 %v628, %v628
    %v693 = vmul.f32 %v629, %v629
    %v694 = vmul.f32 %v630, %v630
    %v695 = vmul.f32 %v631, %v631
    %v696 = vmul.f32 %v632, %v632
    %v697 = vmul.f32 %v633, %v633
    %v698 = vmul.f32 %v634, %v634
    %v699 = vmul.f32 %v635, %v635
    %v700 = vmul.f32 %v636, %v636
    %v701 = vmul.f32 %v637, %v637
    %v702 = vmul.f32 %v638, %v638
    %v703 = vmul.f32 %v639, %v639
    %v704 = vmul.f32 %v640, %v640
    %v705 = vmul.f32 %v641, %v641
    %v706 = vmul.f32 %v642, %v642
    %v707 = vmul.f32 %v643, %v643
    %v708 = vmul.f32 %v644, %v644
    %v709 = vmul.f32 %v645, %v645
    %v710 = vmul.f32 %v646, %v646
    %v711 = vmul.f32 %v647, %v647
    %v712 = vmul.f32 %v648, %v648
    %v713 = vmul.f32 %v649, %v649
    %v714 = vmul.f32 %v650, %v650
    %v715 = vmul.f32 %v651, %v651
    %v716 = vmul.f32 %v652, %v652
    %v717 = vmul.f32 %v653, %v653
    %v718 = vmul.f32 %v654, %v654
    %v719 = vmul.f32 %v655, %v655
    %v720 = vmul.f32 %v656, %v656
    %v721 = vmul.f32 %v657, %v657
    %v722 = vmul.f32 %v658, %v658
    %v723 = vmul.f32 %v659, %v659
    %v724 = vmul.f32 %v660, %v660
    %v725 = vmul.f32 %v661, %v661
    %v726 = vmul.f32 %v662, %v662
    %v727 = vmul.f32 %v663, %v663
    %v728 = vmul.f32 %v664, %v664
    %v729 = vmul.f32 %v665, %v665
    %v730 = vmul.f32 %v666, %v666
    %v731 = vmul.f32 %v667, %v667
    %v732 = vmul.f32 %v668, %v668
    %v733 = vmul.f32 %v669, %v669
    %v734 = vmul.f32 %v670, %v670
    %v735 = vmul.f32 %v671, %v671
    %v736 = vmul.f32 %v672, %v672
    %v737 = vmul.f32 %v673, %v673
    %v738 = vmul.f32 %v674, %v674
    %v739 = vmul.f32 %v675, %v675
    %v740 = vmul.f32 %v676, %v676
    %v741 = vmul.f32 %v677, %v677
    %v742 = vmul.f32 %v678, %v678
    %v743 = vmul.f32 %v679, %v679
    %v744 = vmul.f32 %v680, %v680
    %v745 = vmul.f32 %v681, %v681
    %v746 = vmul.f32 %v682, %v682
    %v747 = vmul.f32 %v683, %v683
    %v748 = vadd.f32 %v684, %v685
    %v749 = vadd.f32 %v748, %v686
    %v750 = vadd.f32 %v749, %v687
    %751 = vadd.xlane.f32.xlu0 %v750
    %v752 = vpop.xlane.xlu0 %751
    %v753 = vadd.f32 %v688, %v689
    %v754 = vadd.f32 %v753, %v690
    %v755 = vadd.f32 %v754, %v691
    %756 = vadd.xlane.f32.xlu0 %v755
    %v757 = vpop.xlane.xlu0 %756
    %v758 = vadd.f32 %v692, %v693
    %v759 = vadd.f32 %v758, %v694
    %v760 = vadd.f32 %v759, %v695
    %761 = vadd.xlane.f32.xlu0 %v760
    %v762 = vpop.xlane.xlu0 %761
    %v763 = vadd.f32 %v696, %v697
    %v764 = vadd.f32 %v763, %v698
    %v765 = vadd.f32 %v764, %v699
    %766 = vadd.xlane.f32.xlu0 %v765
    %v767 = vpop.xlane.xlu0 %766
    %v768 = vadd.f32 %v700, %v701
    %v769 = vadd.f32 %v768, %v702
    %v770 = vadd.f32 %v769, %v703
    %771 = vadd.xlane.f32.xlu0 %v770
    %v772 = vpop.xlane.xlu0 %771
    %v773 = vadd.f32 %v704, %v705
    %v774 = vadd.f32 %v773, %v706
    %v775 = vadd.f32 %v774, %v707
    %776 = vadd.xlane.f32.xlu0 %v775
    %v777 = vpop.xlane.xlu0 %776
    %v778 = vadd.f32 %v708, %v709
    %v779 = vadd.f32 %v778, %v710
    %v780 = vadd.f32 %v779, %v711
    %781 = vadd.xlane.f32.xlu0 %v780
    %v782 = vpop.xlane.xlu0 %781
    %v783 = vadd.f32 %v712, %v713
    %v784 = vadd.f32 %v783, %v714
    %v785 = vadd.f32 %v784, %v715
    %786 = vadd.xlane.f32.xlu0 %v785
    %v787 = vpop.xlane.xlu0 %786
    %v788 = vadd.f32 %v716, %v717
    %v789 = vadd.f32 %v788, %v718
    %v790 = vadd.f32 %v789, %v719
    %791 = vadd.xlane.f32.xlu0 %v790
    %v792 = vpop.xlane.xlu0 %791
    %v793 = vadd.f32 %v720, %v721
    %v794 = vadd.f32 %v793, %v722
    %v795 = vadd.f32 %v794, %v723
    %796 = vadd.xlane.f32.xlu0 %v795
    %v797 = vpop.xlane.xlu0 %796
    %v798 = vadd.f32 %v724, %v725
    %v799 = vadd.f32 %v798, %v726
    %v800 = vadd.f32 %v799, %v727
    %801 = vadd.xlane.f32.xlu0 %v800
    %v802 = vpop.xlane.xlu0 %801
    %v803 = vadd.f32 %v728, %v729
    %v804 = vadd.f32 %v803, %v730
    %v805 = vadd.f32 %v804, %v731
    %806 = vadd.xlane.f32.xlu0 %v805
    %v807 = vpop.xlane.xlu0 %806
    %v808 = vadd.f32 %v732, %v733
    %v809 = vadd.f32 %v808, %v734
    %v810 = vadd.f32 %v809, %v735
    %811 = vadd.xlane.f32.xlu0 %v810
    %v812 = vpop.xlane.xlu0 %811
    %v813 = vadd.f32 %v736, %v737
    %v814 = vadd.f32 %v813, %v738
    %v815 = vadd.f32 %v814, %v739
    %816 = vadd.xlane.f32.xlu0 %v815
    %v817 = vpop.xlane.xlu0 %816
    %v818 = vadd.f32 %v740, %v741
    %v819 = vadd.f32 %v818, %v742
    %v820 = vadd.f32 %v819, %v743
    %821 = vadd.xlane.f32.xlu0 %v820
    %v822 = vpop.xlane.xlu0 %821
    %v823 = vadd.f32 %v744, %v745
    %v824 = vadd.f32 %v823, %v746
    %v825 = vadd.f32 %v824, %v747
    %826 = vadd.xlane.f32.xlu0 %v825
    %v827 = vpop.xlane.xlu0 %826
    %v828 = vrsqrt.pop %v752
    %v829 = vrsqrt.pop %v757
    %v830 = vrsqrt.pop %v762
    %v831 = vrsqrt.pop %v767
    %v832 = vrsqrt.pop %v772
    %v833 = vrsqrt.pop %v777
    %v834 = vrsqrt.pop %v782
    %v835 = vrsqrt.pop %v787
    %v836 = vrsqrt.pop %v792
    %v837 = vrsqrt.pop %v797
    %v838 = vrsqrt.pop %v802
    %v839 = vrsqrt.pop %v807
    %v840 = vrsqrt.pop %v812
    %v841 = vrsqrt.pop %v817
    %v842 = vrsqrt.pop %v822
    %v843 = vrsqrt.pop %v827
    %v844 = vmul.f32 %v620, %v828
    %v845 = vmul.f32 %v621, %v828
    %v846 = vmul.f32 %v622, %v828
    %v847 = vmul.f32 %v623, %v828
    %v848 = vmul.f32 %v624, %v829
    %v849 = vmul.f32 %v625, %v829
    %v850 = vmul.f32 %v626, %v829
    %v851 = vmul.f32 %v627, %v829
    %v852 = vmul.f32 %v628, %v830
    %v853 = vmul.f32 %v629, %v830
    %v854 = vmul.f32 %v630, %v830
    %v855 = vmul.f32 %v631, %v830
    %v856 = vmul.f32 %v632, %v831
    %v857 = vmul.f32 %v633, %v831
    %v858 = vmul.f32 %v634, %v831
    %v859 = vmul.f32 %v635, %v831
    %v860 = vmul.f32 %v636, %v832
    %v861 = vmul.f32 %v637, %v832
    %v862 = vmul.f32 %v638, %v832
    %v863 = vmul.f32 %v639, %v832
    %v864 = vmul.f32 %v640, %v833
    %v865 = vmul.f32 %v641, %v833
    %v866 = vmul.f32 %v642, %v833
    %v867 = vmul.f32 %v643, %v833
    %v868 = vmul.f32 %v644, %v834
    %v869 = vmul.f32 %v645, %v834
    %v870 = vmul.f32 %v646, %v834
    %v871 = vmul.f32 %v647, %v834
    %v872 = vmul.f32 %v648, %v835
    %v873 = vmul.f32 %v649, %v835
    %v874 = vmul.f32 %v650, %v835
    %v875 = vmul.f32 %v651, %v835
    %v876 = vmul.f32 %v652, %v836
    %v877 = vmul.f32 %v653, %v836
    %v878 = vmul.f32 %v654, %v836
    %v879 = vmul.f32 %v655, %v836
    %v880 = vmul.f32 %v656, %v837
    %v881 = vmul.f32 %v657, %v837
    %v882 = vmul.f32 %v658, %v837
    %v883 = vmul.f32 %v659, %v837
    %v884 = vmul.f32 %v660, %v838
    %v885 = vmul.f32 %v661, %v838
    %v886 = vmul.f32 %v662, %v838
    %v887 = vmul.f32 %v663, %v838
    %v888 = vmul.f32 %v664, %v839
    %v889 = vmul.f32 %v665, %v839
    %v890 = vmul.f32 %v666, %v839
    %v891 = vmul.f32 %v667, %v839
    %v892 = vmul.f32 %v668, %v840
    %v893 = vmul.f32 %v669, %v840
    %v894 = vmul.f32 %v670, %v840
    %v895 = vmul.f32 %v671, %v840
    %v896 = vmul.f32 %v672, %v841
    %v897 = vmul.f32 %v673, %v841
    %v898 = vmul.f32 %v674, %v841
    %v899 = vmul.f32 %v675, %v841
    %v900 = vmul.f32 %v676, %v842
    %v901 = vmul.f32 %v677, %v842
    %v902 = vmul.f32 %v678, %v842
    %v903 = vmul.f32 %v679, %v842
    %v904 = vmul.f32 %v680, %v843
    %v905 = vmul.f32 %v681, %v843
    %v906 = vmul.f32 %v682, %v843
    %v907 = vmul.f32 %v683, %v843
    %908 = vmatprep.subr.mxu0 %v845
    %909 = vmatpush1.xpose.msra.mxu0 %v844
    %910 = vmatprep.subr.mxu0 %v849
    %911 = vmatpush1.xpose.msra.mxu0 %v848
    %912 = vmatprep.subr.mxu0 %v853
    %913 = vmatpush1.xpose.msra.mxu0 %v852
    %914 = vmatprep.subr.mxu0 %v857
    %915 = vmatpush1.xpose.msra.mxu0 %v856
    %916 = vmatprep.subr.mxu0 %v861
    %917 = vmatpush1.xpose.msra.mxu0 %v860
    %918 = vmatprep.subr.mxu0 %v865
    %919 = vmatpush1.xpose.msra.mxu0 %v864
    %920 = vmatprep.subr.mxu0 %v869
    %921 = vmatpush1.xpose.msra.mxu0 %v868
    %922 = vmatprep.subr.mxu0 %v873
    %923 = vmatpush1.xpose.msra.mxu0 %v872
    %924 = vmatprep.subr.mxu0 %v877
    %925 = vmatpush1.xpose.msra.mxu0 %v876
    %926 = vmatprep.subr.mxu0 %v881
    %927 = vmatpush1.xpose.msra.mxu0 %v880
    %928 = vmatprep.subr.mxu0 %v885
    %929 = vmatpush1.xpose.msra.mxu0 %v884
    %930 = vmatprep.subr.mxu0 %v889
    %931 = vmatpush1.xpose.msra.mxu0 %v888
    %932 = vmatprep.subr.mxu0 %v893
    %933 = vmatpush1.xpose.msra.mxu0 %v892
    %934 = vmatprep.subr.mxu0 %v897
    %935 = vmatpush1.xpose.msra.mxu0 %v896
    %936 = vmatprep.subr.mxu0 %v901
    %937 = vmatpush1.xpose.msra.mxu0 %v900
    %938 = vmatprep.subr.mxu0 %v905
    %939 = vmatpush1.xpose.msra.mxu0 %v904
    %940 = vmatprep.subr.mxu0 0.0
    %941 = vmatpush1.xpose.msra.mxu0 0.0
    %942 = vmatprep.subr.mxu0 0.0
    %943 = vmatpush1.xpose.msra.mxu0 0.0
    %944 = vmatprep.subr.mxu0 0.0
    %945 = vmatpush1.xpose.msra.mxu0 0.0
    %946 = vmatprep.subr.mxu0 0.0
    %947 = vmatpush1.xpose.msra.mxu0 0.0
    %948 = vmatprep.subr.mxu0 0.0
    %949 = vmatpush1.xpose.msra.mxu0 0.0
    %950 = vmatprep.subr.mxu0 0.0
    %951 = vmatpush1.xpose.msra.mxu0 0.0
    %952 = vmatprep.subr.mxu0 0.0
    %953 = vmatpush1.xpose.msra.mxu0 0.0
    %954 = vmatprep.subr.mxu0 0.0
    %955 = vmatpush1.xpose.msra.mxu0 0.0
    %956 = vmatprep.subr.mxu0 0.0
    %957 = vmatpush1.xpose.msra.mxu0 0.0
    %958 = vmatprep.subr.mxu0 0.0
    %959 = vmatpush1.xpose.msra.mxu0 0.0
    %960 = vmatprep.subr.mxu0 0.0
    %961 = vmatpush1.xpose.msra.mxu0 0.0
    %962 = vmatprep.subr.mxu0 0.0
    %963 = vmatpush1.xpose.msra.mxu0 0.0
    %964 = vmatprep.subr.mxu0 0.0
    %965 = vmatpush1.xpose.msra.mxu0 0.0
    %966 = vmatprep.subr.mxu0 0.0
    %967 = vmatpush1.xpose.msra.mxu0 0.0
    %968 = vmatprep.subr.mxu0 0.0
    %969 = vmatpush1.xpose.msra.mxu0 0.0
    %970 = vmatprep.subr.mxu0 0.0
    %971 = vmatpush1.xpose.msra.mxu0 0.0
    %972 = vmatprep.mubr.f32.mxu0 %v617
    %973 = vmatmul.mubr.f32.gmra.mrb[0].mxu0 %v616
    %v974 = vpop.f32.mrb[0].mxu0
    %v975 = vadd.f32 0.0, %v974
    %v976 = vpop.f32.mrb[0].mxu0
    %977 = vdwg.mxu0
    %978 = vmatprep.subr.mxu0 %v847
    %979 = vmatpush1.xpose.msra.mxu0 %v846
    %980 = vmatprep.subr.mxu0 %v851
    %981 = vmatpush1.xpose.msra.mxu0 %v850
    %982 = vmatprep.subr.mxu0 %v855
    %983 = vmatpush1.xpose.msra.mxu0 %v854
    %984 = vmatprep.subr.mxu0 %v859
    %985 = vmatpush1.xpose.msra.mxu0 %v858
    %986 = vmatprep.subr.mxu0 %v863
    %987 = vmatpush1.xpose.msra.mxu0 %v862
    %988 = vmatprep.subr.mxu0 %v867
    %989 = vmatpush1.xpose.msra.mxu0 %v866
    %990 = vmatprep.subr.mxu0 %v871
    %991 = vmatpush1.xpose.msra.mxu0 %v870
    %992 = vmatprep.subr.mxu0 %v875
    %993 = vmatpush1.xpose.msra.mxu0 %v874
    %994 = vmatprep.subr.mxu0 %v879
    %995 = vmatpush1.xpose.msra.mxu0 %v878
    %996 = vmatprep.subr.mxu0 %v883
    %997 = vmatpush1.xpose.msra.mxu0 %v882
    %998 = vmatprep.subr.mxu0 %v887
    %999 = vmatpush1.xpose.msra.mxu0 %v886
    %1000 = vmatprep.subr.mxu0 %v891
    %1001 = vmatpush1.xpose.msra.mxu0 %v890
    %1002 = vmatprep.subr.mxu0 %v895
    %1003 = vmatpush1.xpose.msra.mxu0 %v894
    %1004 = vmatprep.subr.mxu0 %v899
    %1005 = vmatpush1.xpose.msra.mxu0 %v898
    %1006 = vmatprep.subr.mxu0 %v903
    %1007 = vmatpush1.xpose.msra.mxu0 %v902
    %1008 = vmatprep.subr.mxu0 %v907
    %1009 = vmatpush1.xpose.msra.mxu0 %v906
    %1010 = vmatprep.subr.mxu0 0.0
    %1011 = vmatpush1.xpose.msra.mxu0 0.0
    %1012 = vmatprep.subr.mxu0 0.0
    %1013 = vmatpush1.xpose.msra.mxu0 0.0
    %1014 = vmatprep.subr.mxu0 0.0
    %1015 = vmatpush1.xpose.msra.mxu0 0.0
    %1016 = vmatprep.subr.mxu0 0.0
    %1017 = vmatpush1.xpose.msra.mxu0 0.0
    %1018 = vmatprep.subr.mxu0 0.0
    %1019 = vmatpush1.xpose.msra.mxu0 0.0
    %1020 = vmatprep.subr.mxu0 0.0
    %1021 = vmatpush1.xpose.msra.mxu0 0.0
    %1022 = vmatprep.subr.mxu0 0.0
    %1023 = vmatpush1.xpose.msra.mxu0 0.0
    %1024 = vmatprep.subr.mxu0 0.0
    %1025 = vmatpush1.xpose.msra.mxu0 0.0
    %1026 = vmatprep.subr.mxu0 0.0
    %1027 = vmatpush1.xpose.msra.mxu0 0.0
    %1028 = vmatprep.subr.mxu0 0.0
    %1029 = vmatpush1.xpose.msra.mxu0 0.0
    %1030 = vmatprep.subr.mxu0 0.0
    %1031 = vmatpush1.xpose.msra.mxu0 0.0
    %1032 = vmatprep.subr.mxu0 0.0
    %1033 = vmatpush1.xpose.msra.mxu0 0.0
    %1034 = vmatprep.subr.mxu0 0.0
    %1035 = vmatpush1.xpose.msra.mxu0 0.0
    %1036 = vmatprep.subr.mxu0 0.0
    %1037 = vmatpush1.xpose.msra.mxu0 0.0
    %1038 = vmatprep.subr.mxu0 0.0
    %1039 = vmatpush1.xpose.msra.mxu0 0.0
    %1040 = vmatprep.subr.mxu0 0.0
    %1041 = vmatpush1.xpose.msra.mxu0 0.0
    %1042 = vmatprep.mubr.f32.mxu0 %v619
    %1043 = vmatmul.mubr.f32.gmra.mrb[0].mxu0 %v618
    %v1044 = vpop.f32.mrb[0].mxu0
    %v1045 = vadd.f32 %v975, %v1044
    %v1046 = vpop.f32.mrb[0].mxu0
    %1047 = vdwg.mxu0
    %s1048 = sld [smem:[#allocation2]]
    %v1049 = vstv %s1048
    %v1050 = vmul.f32 %v1049, %v1045
    %1051 = vst [vmem:[#allocation9] sm:$0xff] %v1050
    %1052 = vst [vmem:[#allocation10] sm:$0xff] %v616
    %1053 = vst [vmem:[#allocation10 + $0x8] sm:$0xff] %v617
    %1054 = vst [vmem:[#allocation10 + $0x10] sm:$0xff] %v618
    %1055 = vst [vmem:[#allocation10 + $0x18] sm:$0xff] %v619
    %1056 = vst [vmem:[#allocation12] sm:$0xff] %v844
    %1057 = vst [vmem:[#allocation12 + $0x8] sm:$0xff] %v845
    %1058 = vst [vmem:[#allocation12 + $0x10] sm:$0xff] %v846
    %1059 = vst [vmem:[#allocation12 + $0x18] sm:$0xff] %v847
    %1060 = vst [vmem:[#allocation12 + $0x20] sm:$0xff] %v848
    %1061 = vst [vmem:[#allocation12 + $0x28] sm:$0xff] %v849
    %1062 = vst [vmem:[#allocation12 + $0x30] sm:$0xff] %v850
    %1063 = vst [vmem:[#allocation12 + $0x38] sm:$0xff] %v851
    %1064 = vst [vmem:[#allocation12 + $0x40] sm:$0xff] %v852
    %1065 = vst [vmem:[#allocation12 + $0x48] sm:$0xff] %v853
    %1066 = vst [vmem:[#allocation12 + $0x50] sm:$0xff] %v854
    %1067 = vst [vmem:[#allocation12 + $0x58] sm:$0xff] %v855
    %1068 = vst [vmem:[#allocation12 + $0x60] sm:$0xff] %v856
    %1069 = vst [vmem:[#allocation12 + $0x68] sm:$0xff] %v857
    %1070 = vst [vmem:[#allocation12 + $0x70] sm:$0xff] %v858
    %1071 = vst [vmem:[#allocation12 + $0x78] sm:$0xff] %v859
    %1072 = vst [vmem:[#allocation12 + $0x80] sm:$0xff] %v860
    %1073 = vst [vmem:[#allocation12 + $0x88] sm:$0xff] %v861
    %1074 = vst [vmem:[#allocation12 + $0x90] sm:$0xff] %v862
    %1075 = vst [vmem:[#allocation12 + $0x98] sm:$0xff] %v863
    %1076 = vst [vmem:[#allocation12 + $0xa0] sm:$0xff] %v864
    %1077 = vst [vmem:[#allocation12 + $0xa8] sm:$0xff] %v865
    %1078 = vst [vmem:[#allocation12 + $0xb0] sm:$0xff] %v866
    %1079 = vst [vmem:[#allocation12 + $0xb8] sm:$0xff] %v867
    %1080 = vst [vmem:[#allocation12 + $0xc0] sm:$0xff] %v868
    %1081 = vst [vmem:[#allocation12 + $0xc8] sm:$0xff] %v869
    %1082 = vst [vmem:[#allocation12 + $0xd0] sm:$0xff] %v870
    %1083 = vst [vmem:[#allocation12 + $0xd8] sm:$0xff] %v871
    %1084 = vst [vmem:[#allocation12 + $0xe0] sm:$0xff] %v872
    %1085 = vst [vmem:[#allocation12 + $0xe8] sm:$0xff] %v873
    %1086 = vst [vmem:[#allocation12 + $0xf0] sm:$0xff] %v874
    %1087 = vst [vmem:[#allocation12 + $0xf8] sm:$0xff] %v875
    %1088 = vst [vmem:[#allocation12 + $0x100] sm:$0xff] %v876
    %1089 = vst [vmem:[#allocation12 + $0x108] sm:$0xff] %v877
    %1090 = vst [vmem:[#allocation12 + $0x110] sm:$0xff] %v878
    %1091 = vst [vmem:[#allocation12 + $0x118] sm:$0xff] %v879
    %1092 = vst [vmem:[#allocation12 + $0x120] sm:$0xff] %v880
    %1093 = vst [vmem:[#allocation12 + $0x128] sm:$0xff] %v881
    %1094 = vst [vmem:[#allocation12 + $0x130] sm:$0xff] %v882
    %1095 = vst [vmem:[#allocation12 + $0x138] sm:$0xff] %v883
    %1096 = vst [vmem:[#allocation12 + $0x140] sm:$0xff] %v884
    %1097 = vst [vmem:[#allocation12 + $0x148] sm:$0xff] %v885
    %1098 = vst [vmem:[#allocation12 + $0x150] sm:$0xff] %v886
    %1099 = vst [vmem:[#allocation12 + $0x158] sm:$0xff] %v887
    %1100 = vst [vmem:[#allocation12 + $0x160] sm:$0xff] %v888
    %1101 = vst [vmem:[#allocation12 + $0x168] sm:$0xff] %v889
    %1102 = vst [vmem:[#allocation12 + $0x170] sm:$0xff] %v890
    %1103 = vst [vmem:[#allocation12 + $0x178] sm:$0xff] %v891
    %1104 = vst [vmem:[#allocation12 + $0x180] sm:$0xff] %v892
    %1105 = vst [vmem:[#allocation12 + $0x188] sm:$0xff] %v893
    %1106 = vst [vmem:[#allocation12 + $0x190] sm:$0xff] %v894
    %1107 = vst [vmem:[#allocation12 + $0x198] sm:$0xff] %v895
    %1108 = vst [vmem:[#allocation12 + $0x1a0] sm:$0xff] %v896
    %1109 = vst [vmem:[#allocation12 + $0x1a8] sm:$0xff] %v897
    %1110 = vst [vmem:[#allocation12 + $0x1b0] sm:$0xff] %v898
    %1111 = vst [vmem:[#allocation12 + $0x1b8] sm:$0xff] %v899
    %1112 = vst [vmem:[#allocation12 + $0x1c0] sm:$0xff] %v900
    %1113 = vst [vmem:[#allocation12 + $0x1c8] sm:$0xff] %v901
    %1114 = vst [vmem:[#allocation12 + $0x1d0] sm:$0xff] %v902
    %1115 = vst [vmem:[#allocation12 + $0x1d8] sm:$0xff] %v903
    %1116 = vst [vmem:[#allocation12 + $0x1e0] sm:$0xff] %v904
    %1117 = vst [vmem:[#allocation12 + $0x1e8] sm:$0xff] %v905
    %1118 = vst [vmem:[#allocation12 + $0x1f0] sm:$0xff] %v906
    %1119 = vst [vmem:[#allocation12 + $0x1f8] sm:$0xff] %v907
    // Predicated region
    $region30: #{tpu_custom_call.1} parent=1 // pred_check
      _
    $region31: #{tpu_custom_call.1} parent=1 // pred_check_branch
      %1121 = sbr.rel (0) target = $region33
    $region32: #{tpu_custom_call.1} parent=1 // pred_region
      %s1123 = ssub.s32 128, 128
      %1124 = vsyncadd [#allocation5], %s1123
      %s1126 = sshll.u32 [#allocation9], 4
      %s1127 = int_to_ptr.vmem [resolvable:$true] %s1126
      %1129 = dma.vmem_to_hbm [thread:$0]  %s1127, 128, %s4, [#allocation5]
    $region33: #{tpu_custom_call.1} parent=1 // pred_fallthru
      _
    // Predicated region
    $region34: #{tpu_custom_call.1} parent=1 // pred_check
      _
    $region35: #{tpu_custom_call.1} parent=1 // pred_check_branch
      %1131 = sbr.rel (0) target = $region37
    $region36: #{tpu_custom_call.1} parent=1 // pred_region
      %s1133 = ssub.s32 512, 512
      %1134 = vsyncadd [#allocation11], %s1133
      %s1136 = sshll.u32 [#allocation10], 4
      %s1137 = int_to_ptr.vmem [resolvable:$true] %s1136
      %1139 = dma.vmem_to_hbm [thread:$0]  %s1137, 512, %s5, [#allocation11]
    $region37: #{tpu_custom_call.1} parent=1 // pred_fallthru
      _
    // Predicated region
    $region38: #{tpu_custom_call.1} parent=1 // pred_check
      _
    $region39: #{tpu_custom_call.1} parent=1 // pred_check_branch
      %1141 = sbr.rel (0) target = $region41
    $region40: #{tpu_custom_call.1} parent=1 // pred_region
      %s1143 = ssub.s32 8192, 8192
      %1144 = vsyncadd [#allocation11], %s1143
      %s1145 = sshll.u32 [#allocation12], 4
      %s1146 = int_to_ptr.vmem [resolvable:$true] %s1145
      %1151 = dma.vmem_to_hbm [thread:$0]  %s1146, 8192, %s6, [#allocation11], 512, 512, 32
    $region41: #{tpu_custom_call.1} parent=1 // pred_fallthru
      _
    // Predicated region
    $region42: #{tpu_custom_call.1} parent=1 // pred_check
      _
    $region43: #{tpu_custom_call.1} parent=1 // pred_check_branch
      %1153 = sbr.rel (0) target = $region45
    $region44: #{tpu_custom_call.1} parent=1 // pred_region
      %1154 = dma.done [#allocation5], 128
    $region45: #{tpu_custom_call.1} parent=1 // pred_fallthru
      _
    // Predicated region
    $region46: #{tpu_custom_call.1} parent=1 // pred_check
      _
    $region47: #{tpu_custom_call.1} parent=1 // pred_check_branch
      %1156 = sbr.rel (0) target = $region49
    $region48: #{tpu_custom_call.1} parent=1 // pred_region
      %1157 = dma.done [#allocation11], 512
    $region49: #{tpu_custom_call.1} parent=1 // pred_fallthru
      _
    // Predicated region
    $region50: #{tpu_custom_call.1} parent=1 // pred_check
      _
    $region51: #{tpu_custom_call.1} parent=1 // pred_check_branch
      %1159 = sbr.rel (0) target = $region53
    $region52: #{tpu_custom_call.1} parent=1 // pred_region
      %1160 = dma.done [#allocation11], 8192
    $region53: #{tpu_custom_call.1} parent=1 // pred_fallthru
      _
    %1161 = vsyncpa [#allocation4], 1
    %1162 = vsyncpa [#allocation7], 1
    %1163 = vsyncpa [#allocation5], 1
    %1164 = vsyncpa [#allocation11], 1

</llo_original>
